<compile_context>
chip_gen: v6e
topology: v6e:2x2x1
jax: 0.10.0
libtpu: 0.0.40
codegen_flags: <defaults>
</compile_context>

<pallas_src>
import functools

import jax
import jax.numpy as jnp
from jax import lax
from jax.experimental import pallas as pl
from jax.experimental.pallas import tpu as pltpu

KERNEL_MUL = 2.0   # repeated-squaring trick in the kernel relies on == 2.0
KERNEL_NUM = 5
# TODO(synk): kernel_type='linear' branch (linear_mmd2) not implemented; the
# module default is 'rbf', which is what this kernel reproduces.


def _round_up(x, k):
    return ((x + k - 1) // k) * k


def _mmd_tile_kernel(row_ids_ref, col_ids_ref,
                     xr_ref, xc_ref, sqr_ref, sqc_ref, wr_ref, wc_ref,
                     coef_ref, out_ref):
    """One (tile x tile) block of the multi-bandwidth Gaussian MMD reduction."""
    t = pl.program_id(0)
    i = row_ids_ref[t]
    j = col_ids_ref[t]

    # Pairwise squared L2 distances: gram on the MXU (native/bf16 operands,
    # f32 accumulate).  Squared row norms were precomputed in f32 from the
    # SAME (cast) data, so the diagonal cancels exactly (then clamped at 0).
    gram = lax.dot_general(
        xr_ref[...], xc_ref[...],
        dimension_numbers=(((1,), (1,)), ((), ())),
        preferred_element_type=jnp.float32)                        # (T, T)
    l2 = jnp.maximum(sqr_ref[...] + sqc_ref[...] - 2.0 * gram, 0.0)

    # kernel_mul == 2: evaluate only the widest-bandwidth exponential on the
    # EUP; each narrower-bandwidth kernel is the previous one squared (VPU).
    # coef_ref[0] = -1 / (bandwidth * kernel_mul**(KERNEL_NUM-1)).
    e = jnp.exp(l2 * coef_ref[0])
    k = e
    for _ in range(KERNEL_NUM - 1):
        e = e * e
        k = k + e

    # Loss contribution: sum_rc a_r a_c K_rc  (a = +1/n source, -1/m target,
    # 0 for padding).  No (T,T) weight outer product: reduce along lanes
    # first (XLU), then the (T,1) weighted reduce (VPU).  Off-diagonal tile
    # pairs also cover their mirror (K and a_r a_c symmetric) -> doubled.
    col_red = jnp.sum(k * wc_ref[...], axis=-1, keepdims=True)     # (T, 1)
    partial = jnp.sum(wr_ref[...] * col_red)
    partial = partial * jnp.where(i == j, 1.0, 2.0)
    out_ref[...] = jnp.full(out_ref.shape, partial, dtype=jnp.float32)


@functools.partial(jax.jit, static_argnames=("block_size", "gram_in_bf16"))
def mmd_loss_rbf(source, target, *, block_size=None, gram_in_bf16=True):
    """Pallas MMD (rbf) loss.  source: (n, D), target: (m, D).  f32 scalar.

    block_size: optional tile edge override (rounded to 128).  Default picks
    512 or 256 from a D-aware VMEM estimate (v7x-safe).
    gram_in_bf16: feed the MXU gram in bf16 when inputs are f32 (3-6x MXU
    throughput); row norms use the same cast data so the diagonal stays exact.
    """
    n, d = source.shape
    m, d2 = target.shape
    assert d == d2, "source/target feature dims must match"
    N = n + m

    in_dtype = jnp.promote_types(source.dtype, target.dtype)
    total = jnp.concatenate(
        [source.astype(in_dtype), target.astype(in_dtype)], axis=0)

    # ---- bandwidth (fix_sigma is None): closed form, O(N*D), plain JAX, f32.
    tot32 = total.astype(jnp.float32)
    sum_sq = jnp.sum(tot32 * tot32)
    col_sum = jnp.sum(tot32, axis=0)
    l2_sum = 2.0 * N * sum_sq - 2.0 * jnp.sum(col_sum * col_sum)
    bandwidth = l2_sum / float(N * N - N)
    bandwidth = bandwidth / (KERNEL_MUL ** (KERNEL_NUM // 2))
    # single in-kernel coefficient (widest bandwidth); the rest by squaring.
    coef = jnp.reshape(
        -1.0 / (bandwidth * (KERNEL_MUL ** (KERNEL_NUM - 1))), (1,)
    ).astype(jnp.float32)

    # ---- MXU operand dtype.
    gram_dtype = (jnp.bfloat16
                  if (gram_in_bf16 and jnp.dtype(in_dtype).itemsize >= 4)
                  else in_dtype)
    total_g = total.astype(gram_dtype)
    gram_itemsize = jnp.dtype(gram_dtype).itemsize

    # ---- D-aware tile selection (per-step VMEM estimate, v7x-safe budget).
    d_pad = _round_up(d, 128)

    def tile_vmem(tile):
        return (4 * tile * d_pad * gram_itemsize   # row+col blocks x 2 buffers
                + 4 * tile * tile * 4              # live (T,T) f32 temporaries
                + 8 * tile * 128 * 4               # (T,1)/(1,T) aux blocks
                + 2 * 8 * 128 * 4)                 # output block

    budget = 40 * 1024 * 1024                      # headroom under v7x 64 MiB/TC
    if block_size is None:
        tile = 512 if tile_vmem(512) <= budget else 256
    else:
        tile = _round_up(block_size, 128)
    tile = min(tile, _round_up(N, 128))            # small-N single-tile path

    n_pad = _round_up(N, tile)
    rt = n_pad // tile
    if n_pad > N:
        total_g = jnp.pad(total_g, ((0, n_pad - N), (0, 0)))

    # Squared row norms from the SAME data fed to the MXU (exact diagonal).
    sqn = jnp.sum(total_g.astype(jnp.float32) ** 2, axis=1)
    sq_row = sqn.reshape(n_pad, 1)
    sq_col = sqn.reshape(1, n_pad)

    # Signed quadrant weights (+1/n source, -1/m target, 0 padding).
    w = jnp.concatenate([
        jnp.full((n,), 1.0 / n, dtype=jnp.float32),
        jnp.full((m,), -1.0 / m, dtype=jnp.float32),
        jnp.zeros((n_pad - N,), dtype=jnp.float32)])
    w_row = w.reshape(n_pad, 1)
    w_col = w.reshape(1, n_pad)

    # Upper-triangular tile pairs; off-diagonal tiles doubled in-kernel.
    pairs = [(i, j) for i in range(rt) for j in range(i, rt)]
    tri = len(pairs)
    row_ids = jnp.asarray([p[0] for p in pairs], dtype=jnp.int32)
    col_ids = jnp.asarray([p[1] for p in pairs], dtype=jnp.int32)

    vmem_limit = int(min(48 * 1024 * 1024,
                         max(32 * 1024 * 1024,
                             tile_vmem(tile) + 4 * 1024 * 1024)))
    compiler_params = pltpu.CompilerParams(
        # every grid step writes its own output block -> tile axis is safe to
        # shard across v7x's two TensorCores (no-op on v5e/v6e).
        dimension_semantics=("parallel",),
        vmem_limit_bytes=vmem_limit)

    data_specs = [
        pl.BlockSpec((tile, d), lambda t, ri, ci: (ri[t], 0)),   # row block
        pl.BlockSpec((tile, d), lambda t, ri, ci: (ci[t], 0)),   # col block
        pl.BlockSpec((tile, 1), lambda t, ri, ci: (ri[t], 0)),   # row sq norms
        pl.BlockSpec((1, tile), lambda t, ri, ci: (0, ci[t])),   # col sq norms
        pl.BlockSpec((tile, 1), lambda t, ri, ci: (ri[t], 0)),   # row weights
        pl.BlockSpec((1, tile), lambda t, ri, ci: (0, ci[t])),   # col weights
        pl.BlockSpec(memory_space=pltpu.MemorySpace.SMEM),       # coef (1,)
    ]
    out_spec = pl.BlockSpec((1, 8, 128), lambda t, ri, ci: (t, 0, 0))

    elem = tri * tile * tile
    cost = pl.CostEstimate(
        flops=2 * tri * tile * tile * d + (4 + 2 * (KERNEL_NUM - 1) + 4) * elem,
        transcendentals=elem,                      # 1 exp per element now
        bytes_accessed=tri * (2 * tile * d * gram_itemsize
                              + 16 * tile + 8 * 128 * 4))

    partials = pl.pallas_call(
        _mmd_tile_kernel,
        out_shape=jax.ShapeDtypeStruct((tri, 8, 128), jnp.float32),
        grid_spec=pltpu.PrefetchScalarGridSpec(
            num_scalar_prefetch=2,
            grid=(tri,),
            in_specs=data_specs,
            out_specs=out_spec),
        compiler_params=compiler_params,
        cost_estimate=cost,
    )(row_ids, col_ids, total_g, total_g, sq_row, sq_col, w_row, w_col, coef)

    # Each (8,128) block carries the same per-tile partial; summing the whole
    # tensor is contiguous (no strided [:,0,0] gather) and tiny.
    return jnp.sum(partials) * (1.0 / (8 * 128))


def _mmd_loss_rbf_ref(source, target):
    """Pure-JAX reference mirroring the PyTorch module exactly."""
    n = source.shape[0]
    total = jnp.concatenate([source, target], axis=0).astype(jnp.float32)
    N = total.shape[0]
    diff = total[None, :, :] - total[:, None, :]
    l2 = jnp.sum(diff * diff, axis=2)
    bandwidth = jnp.sum(l2) / (N * N - N)
    bandwidth = bandwidth / (KERNEL_MUL ** (KERNEL_NUM // 2))
    kernels = sum(jnp.exp(-l2 / (bandwidth * KERNEL_MUL ** i))
                  for i in range(KERNEL_NUM))
    xx = jnp.mean(kernels[:n, :n])
    yy = jnp.mean(kernels[n:, n:])
    xy = jnp.mean(kernels[:n, n:])
    yx = jnp.mean(kernels[n:, :n])
    return xx + yy - xy - yx


if __name__ == "__main__":
    key = jax.random.PRNGKey(0)
    k_src, k_tgt, k2s, k2t = jax.random.split(key, 4)

    # Test 1: small single-tile case (matches the module's n x len(x) layout).
    n, m, d = 8, 8, 32
    source = jax.random.normal(k_src, (n, d), dtype=jnp.float32)
    target = jax.random.normal(k_tgt, (m, d), dtype=jnp.float32) + 0.5
    loss = jax.block_until_ready(mmd_loss_rbf(source, target))
    ref = jax.block_until_ready(_mmd_loss_rbf_ref(source, target))
    assert jnp.allclose(loss, ref, rtol=2e-3, atol=3e-4), (loss, ref)

    # Test 2: multi-tile grid with padding and triangular tile doubling.
    n2, m2, d2 = 100, 80, 64
    source2 = jax.random.normal(k2s, (n2, d2), dtype=jnp.float32)
    target2 = jax.random.normal(k2t, (m2, d2), dtype=jnp.float32) + 0.3
    loss2 = jax.block_until_ready(mmd_loss_rbf(source2, target2, block_size=128))
    ref2 = jax.block_until_ready(_mmd_loss_rbf_ref(source2, target2))
    assert jnp.allclose(loss2, ref2, rtol=2e-3, atol=3e-4), (loss2, ref2)

    print("KERNEL_OK")
</pallas_src>

<mosaic_0001>
module attributes {stable_mosaic.version = 11 : i64} {
  func.func @_mmd_tile_kernel(%arg0: i32, %arg1: memref<1xi32, #tpu.memory_space<smem>>, %arg2: memref<1xi32, #tpu.memory_space<smem>>, %arg3: memref<128x32xbf16, #tpu.memory_space<vmem>>, %arg4: memref<128x32xbf16, #tpu.memory_space<vmem>>, %arg5: memref<128x1xf32, #tpu.memory_space<vmem>>, %arg6: memref<1x128xf32, #tpu.memory_space<vmem>>, %arg7: memref<128x1xf32, #tpu.memory_space<vmem>>, %arg8: memref<1x128xf32, #tpu.memory_space<vmem>>, %arg9: memref<1xf32, #tpu.memory_space<smem>>, %arg10: memref<1x8x128xf32, #tpu.memory_space<vmem>>) attributes {dimension_semantics = [#tpu.dimension_semantics<parallel>], iteration_bounds = array<i64: 1>, scalar_prefetch = 2 : i64, scratch_operands = 0 : i64, tpu.core_type = #tpu.core_type<tc>, window_params = [{transform_indices = @transform_0, window_bounds = array<i64: 128, 32>}, {transform_indices = @transform_1, window_bounds = array<i64: 128, 32>}, {transform_indices = @transform_2, window_bounds = array<i64: 128, 1>}, {transform_indices = @transform_3, window_bounds = array<i64: 1, 128>}, {transform_indices = @transform_4, window_bounds = array<i64: 128, 1>}, {transform_indices = @transform_5, window_bounds = array<i64: 1, 128>}, {transform_indices = @transform_6, window_bounds = array<i64: 1>}, {transform_indices = @transform_7, window_bounds = array<i64: 1, 8, 128>}]} {
    %0 = arith.index_cast %arg0 : i32 to index
    %1 = memref.load %arg1[%0] : memref<1xi32, #tpu.memory_space<smem>>
    %2 = arith.index_cast %arg0 : i32 to index
    %3 = memref.load %arg2[%2] : memref<1xi32, #tpu.memory_space<smem>>
    %c0 = arith.constant 0 : index
    %c0_0 = arith.constant 0 : index
    %4 = vector.load %arg3[%c0, %c0_0] : memref<128x32xbf16, #tpu.memory_space<vmem>>, vector<128x32xbf16>
    %c0_1 = arith.constant 0 : index
    %c0_2 = arith.constant 0 : index
    %5 = vector.load %arg4[%c0_1, %c0_2] : memref<128x32xbf16, #tpu.memory_space<vmem>>, vector<128x32xbf16>
    %cst = arith.constant dense<0.000000e+00> : vector<128x128xf32>
    %6 = tpu.matmul %4, %5, %cst {dimension_numbers = #tpu.dot_dimension_numbers<[1], [1], [0], [0], [0, 0, 1, 0], [], []>} : vector<128x32xbf16>, vector<128x32xbf16>, vector<128x128xf32> -> vector<128x128xf32>
    %c0_3 = arith.constant 0 : index
    %c0_4 = arith.constant 0 : index
    %7 = vector.load %arg5[%c0_3, %c0_4] : memref<128x1xf32, #tpu.memory_space<vmem>>, vector<128x1xf32>
    %c0_5 = arith.constant 0 : index
    %c0_6 = arith.constant 0 : index
    %8 = vector.load %arg6[%c0_5, %c0_6] : memref<1x128xf32, #tpu.memory_space<vmem>>, vector<1x128xf32>
    %9 = vector.broadcast %7 : vector<128x1xf32> to vector<128x128xf32>
    %10 = vector.broadcast %8 : vector<1x128xf32> to vector<128x128xf32>
    %11 = arith.addf %9, %10 : vector<128x128xf32>
    %cst_7 = arith.constant 2.000000e+00 : f32
    %12 = vector.broadcast %cst_7 : f32 to vector<128x128xf32>
    %13 = arith.mulf %12, %6 : vector<128x128xf32>
    %14 = arith.subf %11, %13 : vector<128x128xf32>
    %cst_8 = arith.constant 0.000000e+00 : f32
    %15 = vector.broadcast %cst_8 : f32 to vector<128x128xf32>
    %16 = arith.maximumf %14, %15 : vector<128x128xf32>
    %c0_9 = arith.constant 0 : index
    %17 = memref.load %arg9[%c0_9] : memref<1xf32, #tpu.memory_space<smem>>
    %18 = vector.broadcast %17 : f32 to vector<128x128xf32>
    %19 = arith.mulf %16, %18 : vector<128x128xf32>
    %20 = math.exp %19 : vector<128x128xf32>
    %21 = arith.mulf %20, %20 : vector<128x128xf32>
    %22 = arith.addf %20, %21 : vector<128x128xf32>
    %23 = arith.mulf %21, %21 : vector<128x128xf32>
    %24 = arith.addf %22, %23 : vector<128x128xf32>
    %25 = arith.mulf %23, %23 : vector<128x128xf32>
    %26 = arith.addf %24, %25 : vector<128x128xf32>
    %27 = arith.mulf %25, %25 : vector<128x128xf32>
    %28 = arith.addf %26, %27 : vector<128x128xf32>
    %c0_10 = arith.constant 0 : index
    %c0_11 = arith.constant 0 : index
    %29 = vector.load %arg8[%c0_10, %c0_11] : memref<1x128xf32, #tpu.memory_space<vmem>>, vector<1x128xf32>
    %30 = vector.broadcast %29 : vector<1x128xf32> to vector<128x128xf32>
    %31 = arith.mulf %28, %30 : vector<128x128xf32>
    %cst_12 = arith.constant dense<0.000000e+00> : vector<128xf32>
    %32 = vector.multi_reduction <add>, %31, %cst_12 [1] : vector<128x128xf32> to vector<128xf32>
    %33 = vector.shape_cast %32 : vector<128xf32> to vector<128x1xf32>
    %c0_13 = arith.constant 0 : index
    %c0_14 = arith.constant 0 : index
    %34 = vector.load %arg7[%c0_13, %c0_14] : memref<128x1xf32, #tpu.memory_space<vmem>>, vector<128x1xf32>
    %35 = arith.mulf %34, %33 : vector<128x1xf32>
    %36 = vector.shape_cast %35 : vector<128x1xf32> to vector<1x128x1xf32>
    %cst_15 = arith.constant dense<0.000000e+00> : vector<1xf32>
    %37 = vector.multi_reduction <add>, %36, %cst_15 [1, 2] : vector<1x128x1xf32> to vector<1xf32>
    %38 = vector.shape_cast %37 : vector<1xf32> to vector<1x1x1xf32>
    %39 = vector.extract %38[0, 0, 0] : f32 from vector<1x1x1xf32>
    %40 = arith.cmpi eq, %1, %3 : i32
    %cst_16 = arith.constant 1.000000e+00 : f32
    %cst_17 = arith.constant 2.000000e+00 : f32
    %41 = arith.select %40, %cst_16, %cst_17 : f32
    %42 = arith.mulf %39, %41 : f32
    %43 = vector.broadcast %42 : f32 to vector<1x8x128xf32>
    %c0_18 = arith.constant 0 : index
    %c0_19 = arith.constant 0 : index
    %c0_20 = arith.constant 0 : index
    %44 = vector.load %arg10[%c0_18, %c0_19, %c0_20] : memref<1x8x128xf32, #tpu.memory_space<vmem>>, vector<1x8x128xf32>
    tpu.vector_store %arg10[%c0_18, %c0_19, %c0_20], %43 {strides = array<i32>} : memref<1x8x128xf32, #tpu.memory_space<vmem>>, vector<1x8x128xf32>,
    return
  }
  func.func @transform_0(%arg0: i32, %arg1: memref<1xi32, #tpu.memory_space<smem>>, %arg2: memref<1xi32, #tpu.memory_space<smem>>) -> (i32, i32) {
    %0 = arith.index_cast %arg0 : i32 to index
    %1 = memref.load %arg1[%0] : memref<1xi32, #tpu.memory_space<smem>>
    %c0_i32 = arith.constant 0 : i32
    %c0_i32_0 = arith.constant 0 : i32
    return %1, %c0_i32 : i32, i32
  }
  func.func @transform_1(%arg0: i32, %arg1: memref<1xi32, #tpu.memory_space<smem>>, %arg2: memref<1xi32, #tpu.memory_space<smem>>) -> (i32, i32) {
    %0 = arith.index_cast %arg0 : i32 to index
    %1 = memref.load %arg2[%0] : memref<1xi32, #tpu.memory_space<smem>>
    %c0_i32 = arith.constant 0 : i32
    %c0_i32_0 = arith.constant 0 : i32
    return %1, %c0_i32 : i32, i32
  }
  func.func @transform_2(%arg0: i32, %arg1: memref<1xi32, #tpu.memory_space<smem>>, %arg2: memref<1xi32, #tpu.memory_space<smem>>) -> (i32, i32) {
    %0 = arith.index_cast %arg0 : i32 to index
    %1 = memref.load %arg1[%0] : memref<1xi32, #tpu.memory_space<smem>>
    %c0_i32 = arith.constant 0 : i32
    %c0_i32_0 = arith.constant 0 : i32
    return %1, %c0_i32 : i32, i32
  }
  func.func @transform_3(%arg0: i32, %arg1: memref<1xi32, #tpu.memory_space<smem>>, %arg2: memref<1xi32, #tpu.memory_space<smem>>) -> (i32, i32) {
    %0 = arith.index_cast %arg0 : i32 to index
    %1 = memref.load %arg2[%0] : memref<1xi32, #tpu.memory_space<smem>>
    %c0_i32 = arith.constant 0 : i32
    %c0_i32_0 = arith.constant 0 : i32
    return %c0_i32, %1 : i32, i32
  }
  func.func @transform_4(%arg0: i32, %arg1: memref<1xi32, #tpu.memory_space<smem>>, %arg2: memref<1xi32, #tpu.memory_space<smem>>) -> (i32, i32) {
    %0 = arith.index_cast %arg0 : i32 to index
    %1 = memref.load %arg1[%0] : memref<1xi32, #tpu.memory_space<smem>>
    %c0_i32 = arith.constant 0 : i32
    %c0_i32_0 = arith.constant 0 : i32
    return %1, %c0_i32 : i32, i32
  }
  func.func @transform_5(%arg0: i32, %arg1: memref<1xi32, #tpu.memory_space<smem>>, %arg2: memref<1xi32, #tpu.memory_space<smem>>) -> (i32, i32) {
    %0 = arith.index_cast %arg0 : i32 to index
    %1 = memref.load %arg2[%0] : memref<1xi32, #tpu.memory_space<smem>>
    %c0_i32 = arith.constant 0 : i32
    %c0_i32_0 = arith.constant 0 : i32
    return %c0_i32, %1 : i32, i32
  }
  func.func @transform_6(%arg0: i32, %arg1: memref<1xi32, #tpu.memory_space<smem>>, %arg2: memref<1xi32, #tpu.memory_space<smem>>) -> i32 {
    %c0_i32 = arith.constant 0 : i32
    %c0_i32_0 = arith.constant 0 : i32
    return %c0_i32 : i32
  }
  func.func @transform_7(%arg0: i32, %arg1: memref<1xi32, #tpu.memory_space<smem>>, %arg2: memref<1xi32, #tpu.memory_space<smem>>) -> (i32, i32, i32) {
    %c0_i32 = arith.constant 0 : i32
    %c0_i32_0 = arith.constant 0 : i32
    %c0_i32_1 = arith.constant 0 : i32
    return %arg0, %c0_i32, %c0_i32_0 : i32, i32, i32
  }
}

</mosaic_0001>

<llo_original>
// kernel: mmd_loss_rbf.1
$region0: #{mmd_loss_rbf.1}
  #allocation0 [shape = 'u32[]', space=smem, size = 0x4, offset = 0x4, fixed_abs, tag = 'smem constant byte address 0x4 - core index']
  #allocation1 [shape = 'u32[144,128]{1,0:T(1,128)}', space=vmem, size = 0x12000, scoped, tag = 'internal scratch']
  #allocation2 [shape = 's32[1]{0}', space=sflag, size = 0x4, scoped, tag = 'scoped memory for mmd_loss_rbf.1']
  #allocation3 [shape = 's32[1]{0:T(128)S(6)}', space=smem, size = 0x200, scoped, tag = 'prefetched SMEM operand 0']
  #allocation4 [shape = 's32[1]{0:T(128)S(6)}', space=smem, size = 0x200, scoped, tag = 'prefetched SMEM operand 1']
  #allocation5 [shape = 'f32[1]{0:T(128)S(6)}', space=smem, size = 0x200, scoped, tag = 'scoped memory for mmd_loss_rbf.1']
  %s0 = inlined_call_operand.<no memory space> [shape: s32[1], index: 0, kind: input, shape index: {}, may-alias: {0,1}]
  %s1 = inlined_call_operand.<no memory space> [shape: s32[1], index: 1, kind: input, shape index: {}, may-alias: {0,1}]
  %s2 = inlined_call_operand.vmem [shape: bf16[128,32], index: 2, kind: input, shape index: {}, may-alias: {2,3}]
  %s3 = inlined_call_operand.vmem [shape: bf16[128,32], index: 3, kind: input, shape index: {}, may-alias: {2,3}]
  %s4 = inlined_call_operand.vmem [shape: f32[128,1], index: 4, kind: input, shape index: {}]
  %s5 = inlined_call_operand.vmem [shape: f32[1,128], index: 5, kind: input, shape index: {}]
  %s6 = inlined_call_operand.vmem [shape: f32[128,1], index: 6, kind: input, shape index: {}]
  %s7 = inlined_call_operand.vmem [shape: f32[1,128], index: 7, kind: input, shape index: {}]
  %s8 = inlined_call_operand.<no memory space> [shape: f32[1], index: 8, kind: input, shape index: {}]
  %s9 = inlined_call_operand.vmem [shape: f32[1,8,128], index: 9, kind: output, shape index: {}]
  %s10 = sld [smem:[#allocation0]]
  $region38: #{mmd_loss_rbf.1} parent=0
    _
  %s12 = ssub.s32 1, %s10
  %s13 = scalar_select 0, %s12, %s10
  %14 = sst [smem:[#allocation3]] %s0
  %15 = sst [smem:[#allocation4]] %s1
  %16 = sst [smem:[#allocation5]] %s8
  // Predicated region
  $region2: #{mmd_loss_rbf.1} parent=0 // pred_check
    _
  $region3: #{mmd_loss_rbf.1} parent=0 // pred_check_branch
    %18 = sbr.rel (0) target = $region5
  $region4: #{mmd_loss_rbf.1} parent=0 // pred_region
    %s19 = sld [smem:[#allocation3]]
    %s20 = smul.u32 16, %s19
    %p21 = scmp.lt.s32.totalorder %s20, 15
    %s22 = scalar_select %p21, %s20, 15
    %s23 = smul.addr %s22, 4
    %s24 = scalar_lea.vmem %s2, %s23
    %s25 = sld [smem:[#allocation3]]
    %s26 = smul.u32 16, %s25
  $region5: #{mmd_loss_rbf.1} parent=0 // pred_fallthru
    _
  // Predicated region
  $region6: #{mmd_loss_rbf.1} parent=0 // pred_check
    _
  $region7: #{mmd_loss_rbf.1} parent=0 // pred_check_branch
    %28 = sbr.rel (0) target = $region9
  $region8: #{mmd_loss_rbf.1} parent=0 // pred_region
    %s29 = sld [smem:[#allocation4]]
    %s30 = smul.u32 16, %s29
    %p31 = scmp.lt.s32.totalorder %s30, 15
    %s32 = scalar_select %p31, %s30, 15
    %s33 = smul.addr %s32, 4
    %s34 = scalar_lea.vmem %s3, %s33
    %s35 = sld [smem:[#allocation4]]
    %s36 = smul.u32 16, %s35
  $region9: #{mmd_loss_rbf.1} parent=0 // pred_fallthru
    _
  // Predicated region
  $region10: #{mmd_loss_rbf.1} parent=0 // pred_check
    _
  $region11: #{mmd_loss_rbf.1} parent=0 // pred_check_branch
    %38 = sbr.rel (0) target = $region13
  $region12: #{mmd_loss_rbf.1} parent=0 // pred_region
    %s39 = sld [smem:[#allocation3]]
    %s40 = smul.u32 16, %s39
    %p41 = scmp.lt.s32.totalorder %s40, 15
    %s42 = scalar_select %p41, %s40, 15
    %s43 = smul.addr %s42, 8
    %s44 = scalar_lea.vmem %s4, %s43
    %s45 = sld [smem:[#allocation3]]
    %s46 = smul.u32 16, %s45
  $region13: #{mmd_loss_rbf.1} parent=0 // pred_fallthru
    _
  // Predicated region
  $region14: #{mmd_loss_rbf.1} parent=0 // pred_check
    _
  $region15: #{mmd_loss_rbf.1} parent=0 // pred_check_branch
    %48 = sbr.rel (0) target = $region17
  $region16: #{mmd_loss_rbf.1} parent=0 // pred_region
    %s49 = sld [smem:[#allocation4]]
    %p50 = scmp.lt.s32.totalorder %s49, 0
    %s51 = scalar_select %p50, %s49, 0
    %s52 = scalar_lea.vmem %s5, %s51
    %s53 = sld [smem:[#allocation4]]
  $region17: #{mmd_loss_rbf.1} parent=0 // pred_fallthru
    _
  // Predicated region
  $region18: #{mmd_loss_rbf.1} parent=0 // pred_check
    _
  $region19: #{mmd_loss_rbf.1} parent=0 // pred_check_branch
    %55 = sbr.rel (0) target = $region21
  $region20: #{mmd_loss_rbf.1} parent=0 // pred_region
    %s56 = sld [smem:[#allocation3]]
    %s57 = smul.u32 16, %s56
    %p58 = scmp.lt.s32.totalorder %s57, 15
    %s59 = scalar_select %p58, %s57, 15
    %s60 = smul.addr %s59, 8
    %s61 = scalar_lea.vmem %s6, %s60
    %s62 = sld [smem:[#allocation3]]
    %s63 = smul.u32 16, %s62
  $region21: #{mmd_loss_rbf.1} parent=0 // pred_fallthru
    _
  // Predicated region
  $region22: #{mmd_loss_rbf.1} parent=0 // pred_check
    _
  $region23: #{mmd_loss_rbf.1} parent=0 // pred_check_branch
    %65 = sbr.rel (0) target = $region25
  $region24: #{mmd_loss_rbf.1} parent=0 // pred_region
    %s66 = sld [smem:[#allocation4]]
    %p67 = scmp.lt.s32.totalorder %s66, 0
    %s68 = scalar_select %p67, %s66, 0
    %s69 = scalar_lea.vmem %s7, %s68
    %s70 = sld [smem:[#allocation4]]
  $region25: #{mmd_loss_rbf.1} parent=0 // pred_fallthru
    _
  // Predicated region
  $region26: #{mmd_loss_rbf.1} parent=0 // pred_check
    _
  $region27: #{mmd_loss_rbf.1} parent=0 // pred_check_branch
    %72 = sbr.rel (0) target = $region29
  $region28: #{mmd_loss_rbf.1} parent=0 // pred_region
    _
  $region29: #{mmd_loss_rbf.1} parent=0 // pred_fallthru
    _
  %s73 = sld [smem:[#allocation3]]
  %s74 = smul.u32 16, %s73
  %p75 = scmp.lt.s32.totalorder %s74, 15
  %s76 = scalar_select %p75, %s74, 15
  %s77 = smul.addr %s76, 4
  %s78 = scalar_lea.vmem %s2, %s77
  %s79 = sld [smem:[#allocation4]]
  %s80 = smul.u32 16, %s79
  %p81 = scmp.lt.s32.totalorder %s80, 15
  %s82 = scalar_select %p81, %s80, 15
  %s83 = smul.addr %s82, 4
  %s84 = scalar_lea.vmem %s3, %s83
  %s85 = sld [smem:[#allocation3]]
  %s86 = smul.u32 16, %s85
  %p87 = scmp.lt.s32.totalorder %s86, 15
  %s88 = scalar_select %p87, %s86, 15
  %s89 = smul.addr %s88, 8
  %s90 = scalar_lea.vmem %s4, %s89
  %s91 = sld [smem:[#allocation4]]
  %p92 = scmp.lt.s32.totalorder %s91, 0
  %s93 = scalar_select %p92, %s91, 0
  %s94 = scalar_lea.vmem %s5, %s93
  %s95 = sld [smem:[#allocation3]]
  %s96 = smul.u32 16, %s95
  %p97 = scmp.lt.s32.totalorder %s96, 15
  %s98 = scalar_select %p97, %s96, 15
  %s99 = smul.addr %s98, 8
  %s100 = scalar_lea.vmem %s6, %s99
  %s101 = sld [smem:[#allocation4]]
  %p102 = scmp.lt.s32.totalorder %s101, 0
  %s103 = scalar_select %p102, %s101, 0
  %s104 = scalar_lea.vmem %s7, %s103
  %s105 = sld [smem:[#allocation3]]
  %s106 = smul.u32 16, %s105
  %p107 = scmp.lt.s32.totalorder %s106, 15
  %s108 = scalar_select %p107, %s106, 15
  %s109 = smul.addr %s108, 4
  %s110 = scalar_lea.vmem %s2, %s109
  %s111 = sld [smem:[#allocation3]]
  %s112 = smul.u32 16, %s111
  %s113 = sld [smem:[#allocation4]]
  %s114 = smul.u32 16, %s113
  %p115 = scmp.lt.s32.totalorder %s114, 15
  %s116 = scalar_select %p115, %s114, 15
  %s117 = smul.addr %s116, 4
  %s118 = scalar_lea.vmem %s3, %s117
  %s119 = sld [smem:[#allocation4]]
  %s120 = smul.u32 16, %s119
  %s121 = sld [smem:[#allocation3]]
  %s122 = smul.u32 16, %s121
  %p123 = scmp.lt.s32.totalorder %s122, 15
  %s124 = scalar_select %p123, %s122, 15
  %s125 = smul.addr %s124, 8
  %s126 = scalar_lea.vmem %s4, %s125
  %s127 = sld [smem:[#allocation3]]
  %s128 = smul.u32 16, %s127
  %s129 = sld [smem:[#allocation4]]
  %p130 = scmp.lt.s32.totalorder %s129, 0
  %s131 = scalar_select %p130, %s129, 0
  %s132 = scalar_lea.vmem %s5, %s131
  %s133 = sld [smem:[#allocation4]]
  %s134 = sld [smem:[#allocation3]]
  %s135 = smul.u32 16, %s134
  %p136 = scmp.lt.s32.totalorder %s135, 15
  %s137 = scalar_select %p136, %s135, 15
  %s138 = smul.addr %s137, 8
  %s139 = scalar_lea.vmem %s6, %s138
  %s140 = sld [smem:[#allocation3]]
  %s141 = smul.u32 16, %s140
  %s142 = sld [smem:[#allocation4]]
  %p143 = scmp.lt.s32.totalorder %s142, 0
  %s144 = scalar_select %p143, %s142, 0
  %s145 = scalar_lea.vmem %s7, %s144
  %s146 = sld [smem:[#allocation4]]
  %s148 = sld [smem:[#allocation3]]
  %s149 = sld [smem:[#allocation4]]
  %v150 = vld [vmem:[%s110] sm:$0xf]
  %v151 = vld [vmem:[%s110 + $0x4] sm:$0xf]
  %v152 = vld [vmem:[%s110 + $0x8] sm:$0xf]
  %v153 = vld [vmem:[%s110 + $0xc] sm:$0xf]
  %v154 = vld [vmem:[%s110 + $0x10] sm:$0xf]
  %v155 = vld [vmem:[%s110 + $0x14] sm:$0xf]
  %v156 = vld [vmem:[%s110 + $0x18] sm:$0xf]
  %v157 = vld [vmem:[%s110 + $0x1c] sm:$0xf]
  %v158 = vld [vmem:[%s110 + $0x20] sm:$0xf]
  %v159 = vld [vmem:[%s110 + $0x24] sm:$0xf]
  %v160 = vld [vmem:[%s110 + $0x28] sm:$0xf]
  %v161 = vld [vmem:[%s110 + $0x2c] sm:$0xf]
  %v162 = vld [vmem:[%s110 + $0x30] sm:$0xf]
  %v163 = vld [vmem:[%s110 + $0x34] sm:$0xf]
  %v164 = vld [vmem:[%s110 + $0x38] sm:$0xf]
  %v165 = vld [vmem:[%s110 + $0x3c] sm:$0xf]
  %v166 = vld [vmem:[%s118] sm:$0xf]
  %v167 = vld [vmem:[%s118 + $0x4] sm:$0xf]
  %v168 = vld [vmem:[%s118 + $0x8] sm:$0xf]
  %v169 = vld [vmem:[%s118 + $0xc] sm:$0xf]
  %v170 = vld [vmem:[%s118 + $0x10] sm:$0xf]
  %v171 = vld [vmem:[%s118 + $0x14] sm:$0xf]
  %v172 = vld [vmem:[%s118 + $0x18] sm:$0xf]
  %v173 = vld [vmem:[%s118 + $0x1c] sm:$0xf]
  %v174 = vld [vmem:[%s118 + $0x20] sm:$0xf]
  %v175 = vld [vmem:[%s118 + $0x24] sm:$0xf]
  %v176 = vld [vmem:[%s118 + $0x28] sm:$0xf]
  %v177 = vld [vmem:[%s118 + $0x2c] sm:$0xf]
  %v178 = vld [vmem:[%s118 + $0x30] sm:$0xf]
  %v179 = vld [vmem:[%s118 + $0x34] sm:$0xf]
  %v180 = vld [vmem:[%s118 + $0x38] sm:$0xf]
  %v181 = vld [vmem:[%s118 + $0x3c] sm:$0xf]
  %v198 = vunpack.c.l.b16 %v150
  %v199 = vunpack.c.l.b16 %v151
  %v200 = vunpack.c.l.b16 %v152
  %v201 = vunpack.c.l.b16 %v153
  %v202 = vunpack.c.l.b16 %v154
  %v203 = vunpack.c.l.b16 %v155
  %v204 = vunpack.c.l.b16 %v156
  %v205 = vunpack.c.l.b16 %v157
  %v206 = vunpack.c.l.b16 %v158
  %v207 = vunpack.c.l.b16 %v159
  %v208 = vunpack.c.l.b16 %v160
  %v209 = vunpack.c.l.b16 %v161
  %v210 = vunpack.c.l.b16 %v162
  %v211 = vunpack.c.l.b16 %v163
  %v212 = vunpack.c.l.b16 %v164
  %v213 = vunpack.c.l.b16 %v165
  %v214 = vpack.c.b16 %v199, %v198
  %v215 = vpack.c.b16 %v201, %v200
  %v216 = vpack.c.b16 %v203, %v202
  %v217 = vpack.c.b16 %v205, %v204
  %v218 = vpack.c.b16 %v207, %v206
  %v219 = vpack.c.b16 %v209, %v208
  %v220 = vpack.c.b16 %v211, %v210
  %v221 = vpack.c.b16 %v213, %v212
  %v238 = vunpack.c.l.b16 %v166
  %v239 = vunpack.c.l.b16 %v167
  %v240 = vunpack.c.l.b16 %v168
  %v241 = vunpack.c.l.b16 %v169
  %v242 = vunpack.c.l.b16 %v170
  %v243 = vunpack.c.l.b16 %v171
  %v244 = vunpack.c.l.b16 %v172
  %v245 = vunpack.c.l.b16 %v173
  %v246 = vunpack.c.l.b16 %v174
  %v247 = vunpack.c.l.b16 %v175
  %v248 = vunpack.c.l.b16 %v176
  %v249 = vunpack.c.l.b16 %v177
  %v250 = vunpack.c.l.b16 %v178
  %v251 = vunpack.c.l.b16 %v179
  %v252 = vunpack.c.l.b16 %v180
  %v253 = vunpack.c.l.b16 %v181
  %v254 = vpack.c.b16 %v239, %v238
  %v255 = vpack.c.b16 %v241, %v240
  %v256 = vpack.c.b16 %v243, %v242
  %v257 = vpack.c.b16 %v245, %v244
  %v258 = vpack.c.b16 %v247, %v246
  %v259 = vpack.c.b16 %v249, %v248
  %v260 = vpack.c.b16 %v251, %v250
  %v261 = vpack.c.b16 %v253, %v252
  %vm262 = vcmask 261120
  %v264 = vsel %vm262, %v214, 0
  %v267 = vsel %vm262, %v215, 0
  %v270 = vsel %vm262, %v216, 0
  %v273 = vsel %vm262, %v217, 0
  %v276 = vsel %vm262, %v218, 0
  %v279 = vsel %vm262, %v219, 0
  %v282 = vsel %vm262, %v220, 0
  %v285 = vsel %vm262, %v221, 0
  %v288 = vsel %vm262, %v254, 0
  %v291 = vsel %vm262, %v255, 0
  %v294 = vsel %vm262, %v256, 0
  %v297 = vsel %vm262, %v257, 0
  %v300 = vsel %vm262, %v258, 0
  %v303 = vsel %vm262, %v259, 0
  %v306 = vsel %vm262, %v260, 0
  %v309 = vsel %vm262, %v261, 0
  %311 = vmatprep.subr.bf16.mxu0 0
  %312 = vmatpush1.bf16.xpose.msra.mxu0 %v309
  %313 = vmatprep.subr.bf16.mxu0 0
  %314 = vmatpush1.bf16.xpose.msra.mxu0 %v306
  %315 = vmatprep.subr.bf16.mxu0 0
  %316 = vmatpush1.bf16.xpose.msra.mxu0 %v303
  %317 = vmatprep.subr.bf16.mxu0 0
  %318 = vmatpush1.bf16.xpose.msra.mxu0 %v300
  %319 = vmatprep.subr.bf16.mxu0 0
  %320 = vmatpush1.bf16.xpose.msra.mxu0 %v297
  %321 = vmatprep.subr.bf16.mxu0 0
  %322 = vmatpush1.bf16.xpose.msra.mxu0 %v294
  %323 = vmatprep.subr.bf16.mxu0 0
  %324 = vmatpush1.bf16.xpose.msra.mxu0 %v291
  %325 = vmatprep.subr.bf16.mxu0 0
  %326 = vmatpush1.bf16.xpose.msra.mxu0 %v288
  %327 = vmatprep.subr.bf16.mxu0 0
  %328 = vmatpush2.bf16.xpose.msra.mxu0 0
  %329 = vmatprep.subr.bf16.mxu0 0
  %330 = vmatpush2.bf16.xpose.msra.mxu0 0
  %331 = vmatprep.subr.bf16.mxu0 0
  %332 = vmatpush2.bf16.xpose.msra.mxu0 0
  %333 = vmatprep.subr.bf16.mxu0 0
  %334 = vmatpush2.bf16.xpose.msra.mxu0 0
  %335 = vmatprep.subr.bf16.mxu0 0
  %336 = vmatpush2.bf16.xpose.msra.mxu0 0
  %337 = vmatprep.subr.bf16.mxu0 0
  %338 = vmatpush2.bf16.xpose.msra.mxu0 0
  %339 = vmatprep.subr.bf16.mxu0 0
  %340 = vmatpush2.bf16.xpose.msra.mxu0 0
  %341 = vmatprep.subr.bf16.mxu0 0
  %342 = vmatpush2.bf16.xpose.msra.mxu0 0
  %343 = vmatprep.mubr.bf16.mxu0 0
  %344 = vmatmul.mubr.bf16.gmra.mxu0 %v264
  %v345 = vpop.f32.mrf.mxu0
  %v346 = vadd.f32 0.0, %v345
  %v347 = vpop.f32.mrf.mxu0
  %v348 = vpop.f32.mrf.mxu0
  %v349 = vadd.f32 0.0, %v348
  %v350 = vpop.f32.mrf.mxu0
  %351 = vmatprep.mubr.bf16.mxu0 0
  %352 = vmatmul.mubr.bf16.gmra.mxu0 %v267
  %v353 = vpop.f32.mrf.mxu0
  %v354 = vadd.f32 0.0, %v353
  %v355 = vpop.f32.mrf.mxu0
  %v356 = vpop.f32.mrf.mxu0
  %v357 = vadd.f32 0.0, %v356
  %v358 = vpop.f32.mrf.mxu0
  %359 = vmatprep.mubr.bf16.mxu0 0
  %360 = vmatmul.mubr.bf16.gmra.mxu0 %v270
  %v361 = vpop.f32.mrf.mxu0
  %v362 = vadd.f32 0.0, %v361
  %v363 = vpop.f32.mrf.mxu0
  %v364 = vpop.f32.mrf.mxu0
  %v365 = vadd.f32 0.0, %v364
  %v366 = vpop.f32.mrf.mxu0
  %367 = vmatprep.mubr.bf16.mxu0 0
  %368 = vmatmul.mubr.bf16.gmra.mxu0 %v273
  %v369 = vpop.f32.mrf.mxu0
  %v370 = vadd.f32 0.0, %v369
  %v371 = vpop.f32.mrf.mxu0
  %v372 = vpop.f32.mrf.mxu0
  %v373 = vadd.f32 0.0, %v372
  %v374 = vpop.f32.mrf.mxu0
  %375 = vmatprep.mubr.bf16.mxu0 0
  %376 = vmatmul.mubr.bf16.gmra.mxu0 %v276
  %v377 = vpop.f32.mrf.mxu0
  %v378 = vadd.f32 0.0, %v377
  %v379 = vpop.f32.mrf.mxu0
  %v380 = vpop.f32.mrf.mxu0
  %v381 = vadd.f32 0.0, %v380
  %v382 = vpop.f32.mrf.mxu0
  %383 = vmatprep.mubr.bf16.mxu0 0
  %384 = vmatmul.mubr.bf16.gmra.mxu0 %v279
  %v385 = vpop.f32.mrf.mxu0
  %v386 = vadd.f32 0.0, %v385
  %v387 = vpop.f32.mrf.mxu0
  %v388 = vpop.f32.mrf.mxu0
  %v389 = vadd.f32 0.0, %v388
  %v390 = vpop.f32.mrf.mxu0
  %391 = vmatprep.mubr.bf16.mxu0 0
  %392 = vmatmul.mubr.bf16.gmra.mxu0 %v282
  %v393 = vpop.f32.mrf.mxu0
  %v394 = vadd.f32 0.0, %v393
  %v395 = vpop.f32.mrf.mxu0
  %v396 = vpop.f32.mrf.mxu0
  %v397 = vadd.f32 0.0, %v396
  %v398 = vpop.f32.mrf.mxu0
  %399 = vmatprep.mubr.bf16.mxu0 0
  %400 = vmatmul.mubr.bf16.gmra.mxu0 %v285
  %v401 = vpop.f32.mrf.mxu0
  %v402 = vadd.f32 0.0, %v401
  %v403 = vpop.f32.mrf.mxu0
  %v404 = vpop.f32.mrf.mxu0
  %v405 = vadd.f32 0.0, %v404
  %v406 = vpop.f32.mrf.mxu0
  %407 = vdwg.mxu0
  %v408 = vld [vmem:[%s126] sm:$0xff]
  %v409 = vld [vmem:[%s126 + $0x8] sm:$0xff]
  %v410 = vld [vmem:[%s126 + $0x10] sm:$0xff]
  %v411 = vld [vmem:[%s126 + $0x18] sm:$0xff]
  %v412 = vld [vmem:[%s126 + $0x20] sm:$0xff]
  %v413 = vld [vmem:[%s126 + $0x28] sm:$0xff]
  %v414 = vld [vmem:[%s126 + $0x30] sm:$0xff]
  %v415 = vld [vmem:[%s126 + $0x38] sm:$0xff]
  %v416 = vld [vmem:[%s126 + $0x40] sm:$0xff]
  %v417 = vld [vmem:[%s126 + $0x48] sm:$0xff]
  %v418 = vld [vmem:[%s126 + $0x50] sm:$0xff]
  %v419 = vld [vmem:[%s126 + $0x58] sm:$0xff]
  %v420 = vld [vmem:[%s126 + $0x60] sm:$0xff]
  %v421 = vld [vmem:[%s126 + $0x68] sm:$0xff]
  %v422 = vld [vmem:[%s126 + $0x70] sm:$0xff]
  %v423 = vld [vmem:[%s126 + $0x78] sm:$0xff]
  %v424 = vld [vmem:[%s132] sm:$0x1]
  %426 = vset.pattern.permute.xlu0 0
  %427 = vperm.xlu0 %426, %v408
  %v428 = vpop.permute.xlu0 %427
  %431 = vset.pattern.permute.xlu0 0
  %432 = vperm.xlu0 %431, %v409
  %v433 = vpop.permute.xlu0 %432
  %436 = vset.pattern.permute.xlu0 0
  %437 = vperm.xlu0 %436, %v410
  %v438 = vpop.permute.xlu0 %437
  %441 = vset.pattern.permute.xlu0 0
  %442 = vperm.xlu0 %441, %v411
  %v443 = vpop.permute.xlu0 %442
  %446 = vset.pattern.permute.xlu0 0
  %447 = vperm.xlu0 %446, %v412
  %v448 = vpop.permute.xlu0 %447
  %451 = vset.pattern.permute.xlu0 0
  %452 = vperm.xlu0 %451, %v413
  %v453 = vpop.permute.xlu0 %452
  %456 = vset.pattern.permute.xlu0 0
  %457 = vperm.xlu0 %456, %v414
  %v458 = vpop.permute.xlu0 %457
  %461 = vset.pattern.permute.xlu0 0
  %462 = vperm.xlu0 %461, %v415
  %v463 = vpop.permute.xlu0 %462
  %466 = vset.pattern.permute.xlu0 0
  %467 = vperm.xlu0 %466, %v416
  %v468 = vpop.permute.xlu0 %467
  %471 = vset.pattern.permute.xlu0 0
  %472 = vperm.xlu0 %471, %v417
  %v473 = vpop.permute.xlu0 %472
  %476 = vset.pattern.permute.xlu0 0
  %477 = vperm.xlu0 %476, %v418
  %v478 = vpop.permute.xlu0 %477
  %481 = vset.pattern.permute.xlu0 0
  %482 = vperm.xlu0 %481, %v419
  %v483 = vpop.permute.xlu0 %482
  %486 = vset.pattern.permute.xlu0 0
  %487 = vperm.xlu0 %486, %v420
  %v488 = vpop.permute.xlu0 %487
  %491 = vset.pattern.permute.xlu0 0
  %492 = vperm.xlu0 %491, %v421
  %v493 = vpop.permute.xlu0 %492
  %496 = vset.pattern.permute.xlu0 0
  %497 = vperm.xlu0 %496, %v422
  %v498 = vpop.permute.xlu0 %497
  %501 = vset.pattern.permute.xlu0 0
  %502 = vperm.xlu0 %501, %v423
  %v503 = vpop.permute.xlu0 %502
  %v506 = vlaneseq
  %v507 = vshrl.u32 %v506, 7
  %v508 = vsub.s32 0, %v507
  %v509 = vrot.slane %v424, %v508
  %v511 = vadd.f32 %v428, %v509
  %v512 = vadd.f32 %v433, %v509
  %v513 = vadd.f32 %v438, %v509
  %v514 = vadd.f32 %v443, %v509
  %v515 = vadd.f32 %v448, %v509
  %v516 = vadd.f32 %v453, %v509
  %v517 = vadd.f32 %v458, %v509
  %v518 = vadd.f32 %v463, %v509
  %v519 = vadd.f32 %v468, %v509
  %v520 = vadd.f32 %v473, %v509
  %v521 = vadd.f32 %v478, %v509
  %v522 = vadd.f32 %v483, %v509
  %v523 = vadd.f32 %v488, %v509
  %v524 = vadd.f32 %v493, %v509
  %v525 = vadd.f32 %v498, %v509
  %v526 = vadd.f32 %v503, %v509
  %v527 = vmul.f32 %v346, 2.0
  %v528 = vmul.f32 %v349, 2.0
  %v529 = vmul.f32 %v354, 2.0
  %v530 = vmul.f32 %v357, 2.0
  %v531 = vmul.f32 %v362, 2.0
  %v532 = vmul.f32 %v365, 2.0
  %v533 = vmul.f32 %v370, 2.0
  %v534 = vmul.f32 %v373, 2.0
  %v535 = vmul.f32 %v378, 2.0
  %v536 = vmul.f32 %v381, 2.0
  %v537 = vmul.f32 %v386, 2.0
  %v538 = vmul.f32 %v389, 2.0
  %v539 = vmul.f32 %v394, 2.0
  %v540 = vmul.f32 %v397, 2.0
  %v541 = vmul.f32 %v402, 2.0
  %v542 = vmul.f32 %v405, 2.0
  %v543 = vsub.f32 %v511, %v527
  %v544 = vsub.f32 %v512, %v528
  %v545 = vsub.f32 %v513, %v529
  %v546 = vsub.f32 %v514, %v530
  %v547 = vsub.f32 %v515, %v531
  %v548 = vsub.f32 %v516, %v532
  %v549 = vsub.f32 %v517, %v533
  %v550 = vsub.f32 %v518, %v534
  %v551 = vsub.f32 %v519, %v535
  %v552 = vsub.f32 %v520, %v536
  %v553 = vsub.f32 %v521, %v537
  %v554 = vsub.f32 %v522, %v538
  %v555 = vsub.f32 %v523, %v539
  %v556 = vsub.f32 %v524, %v540
  %v557 = vsub.f32 %v525, %v541
  %v558 = vsub.f32 %v526, %v542
  %v559 = vmax.f32 %v543, 0.0
  %v560 = vmax.f32 %v544, 0.0
  %v561 = vmax.f32 %v545, 0.0
  %v562 = vmax.f32 %v546, 0.0
  %v563 = vmax.f32 %v547, 0.0
  %v564 = vmax.f32 %v548, 0.0
  %v565 = vmax.f32 %v549, 0.0
  %v566 = vmax.f32 %v550, 0.0
  %v567 = vmax.f32 %v551, 0.0
  %v568 = vmax.f32 %v552, 0.0
  %v569 = vmax.f32 %v553, 0.0
  %v570 = vmax.f32 %v554, 0.0
  %v571 = vmax.f32 %v555, 0.0
  %v572 = vmax.f32 %v556, 0.0
  %v573 = vmax.f32 %v557, 0.0
  %v574 = vmax.f32 %v558, 0.0
  %s575 = sld [smem:[#allocation5]]
  %v576 = vstv %s575
  %v577 = vmul.f32 %v559, %v576
  %v578 = vmul.f32 %v560, %v576
  %v579 = vmul.f32 %v561, %v576
  %v580 = vmul.f32 %v562, %v576
  %v581 = vmul.f32 %v563, %v576
  %v582 = vmul.f32 %v564, %v576
  %v583 = vmul.f32 %v565, %v576
  %v584 = vmul.f32 %v566, %v576
  %v585 = vmul.f32 %v567, %v576
  %v586 = vmul.f32 %v568, %v576
  %v587 = vmul.f32 %v569, %v576
  %v588 = vmul.f32 %v570, %v576
  %v589 = vmul.f32 %v571, %v576
  %v590 = vmul.f32 %v572, %v576
  %v591 = vmul.f32 %v573, %v576
  %v592 = vmul.f32 %v574, %v576
  %v593 = vmul.f32 %v577, 1.442695
  %v594 = vpow.pop %v593
  %v595 = vmul.f32 %v578, 1.442695
  %v596 = vpow.pop %v595
  %v597 = vmul.f32 %v579, 1.442695
  %v598 = vpow.pop %v597
  %v599 = vmul.f32 %v580, 1.442695
  %v600 = vpow.pop %v599
  %v601 = vmul.f32 %v581, 1.442695
  %v602 = vpow.pop %v601
  %v603 = vmul.f32 %v582, 1.442695
  %v604 = vpow.pop %v603
  %v605 = vmul.f32 %v583, 1.442695
  %v606 = vpow.pop %v605
  %v607 = vmul.f32 %v584, 1.442695
  %v608 = vpow.pop %v607
  %v609 = vmul.f32 %v585, 1.442695
  %v610 = vpow.pop %v609
  %v611 = vmul.f32 %v586, 1.442695
  %v612 = vpow.pop %v611
  %v613 = vmul.f32 %v587, 1.442695
  %v614 = vpow.pop %v613
  %v615 = vmul.f32 %v588, 1.442695
  %v616 = vpow.pop %v615
  %v617 = vmul.f32 %v589, 1.442695
  %v618 = vpow.pop %v617
  %v619 = vmul.f32 %v590, 1.442695
  %v620 = vpow.pop %v619
  %v621 = vmul.f32 %v591, 1.442695
  %v622 = vpow.pop %v621
  %v623 = vmul.f32 %v592, 1.442695
  %v624 = vpow.pop %v623
  %v625 = vmul.f32 %v594, %v594
  %v626 = vmul.f32 %v596, %v596
  %v627 = vmul.f32 %v598, %v598
  %v628 = vmul.f32 %v600, %v600
  %v629 = vmul.f32 %v602, %v602
  %v630 = vmul.f32 %v604, %v604
  %v631 = vmul.f32 %v606, %v606
  %v632 = vmul.f32 %v608, %v608
  %v633 = vmul.f32 %v610, %v610
  %v634 = vmul.f32 %v612, %v612
  %v635 = vmul.f32 %v614, %v614
  %v636 = vmul.f32 %v616, %v616
  %v637 = vmul.f32 %v618, %v618
  %v638 = vmul.f32 %v620, %v620
  %v639 = vmul.f32 %v622, %v622
  %v640 = vmul.f32 %v624, %v624
  %v641 = vadd.f32 %v594, %v625
  %v642 = vadd.f32 %v596, %v626
  %v643 = vadd.f32 %v598, %v627
  %v644 = vadd.f32 %v600, %v628
  %v645 = vadd.f32 %v602, %v629
  %v646 = vadd.f32 %v604, %v630
  %v647 = vadd.f32 %v606, %v631
  %v648 = vadd.f32 %v608, %v632
  %v649 = vadd.f32 %v610, %v633
  %v650 = vadd.f32 %v612, %v634
  %v651 = vadd.f32 %v614, %v635
  %v652 = vadd.f32 %v616, %v636
  %v653 = vadd.f32 %v618, %v637
  %v654 = vadd.f32 %v620, %v638
  %v655 = vadd.f32 %v622, %v639
  %v656 = vadd.f32 %v624, %v640
  %v657 = vmul.f32 %v625, %v625
  %v658 = vmul.f32 %v626, %v626
  %v659 = vmul.f32 %v627, %v627
  %v660 = vmul.f32 %v628, %v628
  %v661 = vmul.f32 %v629, %v629
  %v662 = vmul.f32 %v630, %v630
  %v663 = vmul.f32 %v631, %v631
  %v664 = vmul.f32 %v632, %v632
  %v665 = vmul.f32 %v633, %v633
  %v666 = vmul.f32 %v634, %v634
  %v667 = vmul.f32 %v635, %v635
  %v668 = vmul.f32 %v636, %v636
  %v669 = vmul.f32 %v637, %v637
  %v670 = vmul.f32 %v638, %v638
  %v671 = vmul.f32 %v639, %v639
  %v672 = vmul.f32 %v640, %v640
  %v673 = vadd.f32 %v641, %v657
  %v674 = vadd.f32 %v642, %v658
  %v675 = vadd.f32 %v643, %v659
  %v676 = vadd.f32 %v644, %v660
  %v677 = vadd.f32 %v645, %v661
  %v678 = vadd.f32 %v646, %v662
  %v679 = vadd.f32 %v647, %v663
  %v680 = vadd.f32 %v648, %v664
  %v681 = vadd.f32 %v649, %v665
  %v682 = vadd.f32 %v650, %v666
  %v683 = vadd.f32 %v651, %v667
  %v684 = vadd.f32 %v652, %v668
  %v685 = vadd.f32 %v653, %v669
  %v686 = vadd.f32 %v654, %v670
  %v687 = vadd.f32 %v655, %v671
  %v688 = vadd.f32 %v656, %v672
  %v689 = vmul.f32 %v657, %v657
  %v690 = vmul.f32 %v658, %v658
  %v691 = vmul.f32 %v659, %v659
  %v692 = vmul.f32 %v660, %v660
  %v693 = vmul.f32 %v661, %v661
  %v694 = vmul.f32 %v662, %v662
  %v695 = vmul.f32 %v663, %v663
  %v696 = vmul.f32 %v664, %v664
  %v697 = vmul.f32 %v665, %v665
  %v698 = vmul.f32 %v666, %v666
  %v699 = vmul.f32 %v667, %v667
  %v700 = vmul.f32 %v668, %v668
  %v701 = vmul.f32 %v669, %v669
  %v702 = vmul.f32 %v670, %v670
  %v703 = vmul.f32 %v671, %v671
  %v704 = vmul.f32 %v672, %v672
  %v705 = vadd.f32 %v673, %v689
  %v706 = vadd.f32 %v674, %v690
  %v707 = vadd.f32 %v675, %v691
  %v708 = vadd.f32 %v676, %v692
  %v709 = vadd.f32 %v677, %v693
  %v710 = vadd.f32 %v678, %v694
  %v711 = vadd.f32 %v679, %v695
  %v712 = vadd.f32 %v680, %v696
  %v713 = vadd.f32 %v681, %v697
  %v714 = vadd.f32 %v682, %v698
  %v715 = vadd.f32 %v683, %v699
  %v716 = vadd.f32 %v684, %v700
  %v717 = vadd.f32 %v685, %v701
  %v718 = vadd.f32 %v686, %v702
  %v719 = vadd.f32 %v687, %v703
  %v720 = vadd.f32 %v688, %v704
  %v721 = vmul.f32 %v689, %v689
  %v722 = vmul.f32 %v690, %v690
  %v723 = vmul.f32 %v691, %v691
  %v724 = vmul.f32 %v692, %v692
  %v725 = vmul.f32 %v693, %v693
  %v726 = vmul.f32 %v694, %v694
  %v727 = vmul.f32 %v695, %v695
  %v728 = vmul.f32 %v696, %v696
  %v729 = vmul.f32 %v697, %v697
  %v730 = vmul.f32 %v698, %v698
  %v731 = vmul.f32 %v699, %v699
  %v732 = vmul.f32 %v700, %v700
  %v733 = vmul.f32 %v701, %v701
  %v734 = vmul.f32 %v702, %v702
  %v735 = vmul.f32 %v703, %v703
  %v736 = vmul.f32 %v704, %v704
  %v737 = vadd.f32 %v705, %v721
  %v738 = vadd.f32 %v706, %v722
  %v739 = vadd.f32 %v707, %v723
  %v740 = vadd.f32 %v708, %v724
  %v741 = vadd.f32 %v709, %v725
  %v742 = vadd.f32 %v710, %v726
  %v743 = vadd.f32 %v711, %v727
  %v744 = vadd.f32 %v712, %v728
  %v745 = vadd.f32 %v713, %v729
  %v746 = vadd.f32 %v714, %v730
  %v747 = vadd.f32 %v715, %v731
  %v748 = vadd.f32 %v716, %v732
  %v749 = vadd.f32 %v717, %v733
  %v750 = vadd.f32 %v718, %v734
  %v751 = vadd.f32 %v719, %v735
  %v752 = vadd.f32 %v720, %v736
  %v753 = vld [vmem:[%s145] sm:$0x1]
  %v755 = vlaneseq
  %v756 = vshrl.u32 %v755, 7
  %v757 = vsub.s32 0, %v756
  %v758 = vrot.slane %v753, %v757
  %v760 = vmul.f32 %v737, %v758
  %v761 = vmul.f32 %v738, %v758
  %v762 = vmul.f32 %v739, %v758
  %v763 = vmul.f32 %v740, %v758
  %v764 = vmul.f32 %v741, %v758
  %v765 = vmul.f32 %v742, %v758
  %v766 = vmul.f32 %v743, %v758
  %v767 = vmul.f32 %v744, %v758
  %v768 = vmul.f32 %v745, %v758
  %v769 = vmul.f32 %v746, %v758
  %v770 = vmul.f32 %v747, %v758
  %v771 = vmul.f32 %v748, %v758
  %v772 = vmul.f32 %v749, %v758
  %v773 = vmul.f32 %v750, %v758
  %v774 = vmul.f32 %v751, %v758
  %v775 = vmul.f32 %v752, %v758
  %776 = vadd.xlane.f32.xlu0 %v760
  %v777 = vpop.xlane.xlu0 %776
  %778 = vadd.xlane.f32.xlu0 %v761
  %v779 = vpop.xlane.xlu0 %778
  %780 = vadd.xlane.f32.xlu0 %v762
  %v781 = vpop.xlane.xlu0 %780
  %782 = vadd.xlane.f32.xlu0 %v763
  %v783 = vpop.xlane.xlu0 %782
  %784 = vadd.xlane.f32.xlu0 %v764
  %v785 = vpop.xlane.xlu0 %784
  %786 = vadd.xlane.f32.xlu0 %v765
  %v787 = vpop.xlane.xlu0 %786
  %788 = vadd.xlane.f32.xlu0 %v766
  %v789 = vpop.xlane.xlu0 %788
  %790 = vadd.xlane.f32.xlu0 %v767
  %v791 = vpop.xlane.xlu0 %790
  %792 = vadd.xlane.f32.xlu0 %v768
  %v793 = vpop.xlane.xlu0 %792
  %794 = vadd.xlane.f32.xlu0 %v769
  %v795 = vpop.xlane.xlu0 %794
  %796 = vadd.xlane.f32.xlu0 %v770
  %v797 = vpop.xlane.xlu0 %796
  %798 = vadd.xlane.f32.xlu0 %v771
  %v799 = vpop.xlane.xlu0 %798
  %800 = vadd.xlane.f32.xlu0 %v772
  %v801 = vpop.xlane.xlu0 %800
  %802 = vadd.xlane.f32.xlu0 %v773
  %v803 = vpop.xlane.xlu0 %802
  %804 = vadd.xlane.f32.xlu0 %v774
  %v805 = vpop.xlane.xlu0 %804
  %806 = vadd.xlane.f32.xlu0 %v775
  %v807 = vpop.xlane.xlu0 %806
  %v808 = vld [vmem:[%s139] sm:$0xff]
  %v809 = vld [vmem:[%s139 + $0x8] sm:$0xff]
  %v810 = vld [vmem:[%s139 + $0x10] sm:$0xff]
  %v811 = vld [vmem:[%s139 + $0x18] sm:$0xff]
  %v812 = vld [vmem:[%s139 + $0x20] sm:$0xff]
  %v813 = vld [vmem:[%s139 + $0x28] sm:$0xff]
  %v814 = vld [vmem:[%s139 + $0x30] sm:$0xff]
  %v815 = vld [vmem:[%s139 + $0x38] sm:$0xff]
  %v816 = vld [vmem:[%s139 + $0x40] sm:$0xff]
  %v817 = vld [vmem:[%s139 + $0x48] sm:$0xff]
  %v818 = vld [vmem:[%s139 + $0x50] sm:$0xff]
  %v819 = vld [vmem:[%s139 + $0x58] sm:$0xff]
  %v820 = vld [vmem:[%s139 + $0x60] sm:$0xff]
  %v821 = vld [vmem:[%s139 + $0x68] sm:$0xff]
  %v822 = vld [vmem:[%s139 + $0x70] sm:$0xff]
  %v823 = vld [vmem:[%s139 + $0x78] sm:$0xff]
  %v824 = vmul.f32 %v808, %v777
  %v825 = vmul.f32 %v809, %v779
  %v826 = vmul.f32 %v810, %v781
  %v827 = vmul.f32 %v811, %v783
  %v828 = vmul.f32 %v812, %v785
  %v829 = vmul.f32 %v813, %v787
  %v830 = vmul.f32 %v814, %v789
  %v831 = vmul.f32 %v815, %v791
  %v832 = vmul.f32 %v816, %v793
  %v833 = vmul.f32 %v817, %v795
  %v834 = vmul.f32 %v818, %v797
  %v835 = vmul.f32 %v819, %v799
  %v836 = vmul.f32 %v820, %v801
  %v837 = vmul.f32 %v821, %v803
  %v838 = vmul.f32 %v822, %v805
  %v839 = vmul.f32 %v823, %v807
  %vm840 = vcmask 7168
  %v841 = vsel %vm840, %v824, 0.0
  %v842 = vsel %vm840, %v825, 0.0
  %v843 = vadd.f32 %v841, %v842
  %v844 = vsel %vm840, %v826, 0.0
  %v845 = vadd.f32 %v843, %v844
  %v846 = vsel %vm840, %v827, 0.0
  %v847 = vadd.f32 %v845, %v846
  %v848 = vsel %vm840, %v828, 0.0
  %v849 = vadd.f32 %v847, %v848
  %v850 = vsel %vm840, %v829, 0.0
  %v851 = vadd.f32 %v849, %v850
  %v852 = vsel %vm840, %v830, 0.0
  %v853 = vadd.f32 %v851, %v852
  %v854 = vsel %vm840, %v831, 0.0
  %v855 = vadd.f32 %v853, %v854
  %v856 = vsel %vm840, %v832, 0.0
  %v857 = vadd.f32 %v855, %v856
  %v858 = vsel %vm840, %v833, 0.0
  %v859 = vadd.f32 %v857, %v858
  %v860 = vsel %vm840, %v834, 0.0
  %v861 = vadd.f32 %v859, %v860
  %v862 = vsel %vm840, %v835, 0.0
  %v863 = vadd.f32 %v861, %v862
  %v864 = vsel %vm840, %v836, 0.0
  %v865 = vadd.f32 %v863, %v864
  %v866 = vsel %vm840, %v837, 0.0
  %v867 = vadd.f32 %v865, %v866
  %v868 = vsel %vm840, %v838, 0.0
  %v869 = vadd.f32 %v867, %v868
  %v870 = vsel %vm840, %v839, 0.0
  %v871 = vadd.f32 %v869, %v870
  %872 = vadd.xlane.f32.xlu0 %v871
  %v873 = vpop.xlane.xlu0 %872
  %v874 = vrot.slane %v873, 4
  %v875 = vadd.f32 %v873, %v874
  %v876 = vrot.slane %v875, 2
  %v877 = vadd.f32 %v875, %v876
  %v878 = vrot.slane %v877, 1
  %v879 = vadd.f32 %v877, %v878
  %s880 = vtos %v879
  %p881 = scmp.eq.s32.totalorder %s148, %s149
  %s882 = scalar_select %p881, 1.0, 2.0
  %s883 = smul.f32 %s880, %s882
  %v884 = vstv %s883
  %885 = vst [vmem:[%s9] sm:$0xff] %v884
  // Predicated region
  $region30: #{mmd_loss_rbf.1} parent=0 // pred_check
    _
  $region31: #{mmd_loss_rbf.1} parent=0 // pred_check_branch
    %887 = sbr.rel (0) target = $region33
  $region32: #{mmd_loss_rbf.1} parent=0 // pred_region
    _
  $region33: #{mmd_loss_rbf.1} parent=0 // pred_fallthru
    _
  // Predicated region
  $region34: #{mmd_loss_rbf.1} parent=0 // pred_check
    _
  $region35: #{mmd_loss_rbf.1} parent=0 // pred_check_branch
    %889 = sbr.rel (0) target = $region37
  $region36: #{mmd_loss_rbf.1} parent=0 // pred_region
    _
  $region37: #{mmd_loss_rbf.1} parent=0 // pred_fallthru
    _

</llo_original>
